<compile_context>
chip_gen: v7x
topology: tpu7x:2x2x1
jax: 0.10.0
libtpu: 0.0.40
codegen_flags: <defaults>
</compile_context>

<pallas_src>
import jax
import jax.numpy as jnp
from jax.experimental import pallas as pl
from jax.experimental.pallas import tpu as pltpu


def autoencoder_kernel(x_ref,
                       w_e1_ref, b_e1_ref,
                       w_cat_ref, b_cat_ref,
                       w_d2_ref, b_d2_ref,
                       z_ref, xr_ref):
    x = x_ref[...]

    # ---- encoder layer 1 + ReLU (f32 accumulation on the MXU, f32 VPU work) ----
    h = jnp.dot(x, w_e1_ref[...], preferred_element_type=jnp.float32) + b_e1_ref[...]
    h = jnp.maximum(h, 0.0)
    h_op = h.astype(w_cat_ref.dtype)          # cast once for the fused matmul

    # ---- single MXU pass: columns [0:hidden) = folded enc-L2 @ dec-L1 path, [hidden:) = z ----
    y = jnp.dot(h_op, w_cat_ref[...], preferred_element_type=jnp.float32) + b_cat_ref[...]
    hidden = w_d2_ref.shape[0]                # 128 (static)
    z_ref[...] = y[:, hidden:].astype(z_ref.dtype)
    h2 = jnp.maximum(y[:, :hidden], 0.0)      # relu of (z @ W_d1 + b_d1), folded

    # ---- decoder layer 2 -> reconstruction ----
    xr = jnp.dot(h2.astype(w_d2_ref.dtype), w_d2_ref[...],
                 preferred_element_type=jnp.float32) + b_d2_ref[...]
    xr_ref[...] = xr.astype(xr_ref.dtype)


def _round_up(v, m):
    return ((v + m - 1) // m) * m


def autoencoder_forward(x, params, *, tm=8192, compute_dtype=jnp.float32, out_dtype=None):
    """x: (B, input_dim). params: dict of weights/biases. Returns (z, x_recon) in out_dtype."""
    B, input_dim = x.shape
    hidden = params["w_e1"].shape[1]
    latent_dim = params["w_e2"].shape[1]
    cd = compute_dtype
    od = x.dtype if out_dtype is None else out_dtype

    # Fold encoder-L2 . decoder-L1 (exact: no nonlinearity between them), then column-concat with
    # encoder-L2 so one matmul over h yields both the decoder hidden (lanes [0:128)) and z.
    w_fold = params["w_e2"].astype(jnp.float32) @ params["w_d1"].astype(jnp.float32)
    b_fold = (params["b_e2"].astype(jnp.float32) @ params["w_d1"].astype(jnp.float32)
              + params["b_d1"].astype(jnp.float32))
    w_cat = jnp.concatenate([w_fold, params["w_e2"].astype(jnp.float32)], axis=1)   # (128, 160)
    b_cat = jnp.concatenate([b_fold, params["b_e2"].astype(jnp.float32)], axis=1)   # (1, 160)

    weights = (
        params["w_e1"].astype(cd), params["b_e1"].astype(jnp.float32),
        w_cat.astype(cd),          b_cat,
        params["w_d2"].astype(cd), params["b_d2"].astype(jnp.float32),
    )

    # Batch tiling: no padding of x. Aim for >= 2 grid steps when possible (DMA/compute overlap and
    # 2-TC sharding on v7x); rows per tile are a multiple of 16 (bf16 packed-sublane friendly).
    target = max(16, _round_up(pl.cdiv(B, 2), 16))
    tm_eff = _round_up(min(int(tm), target), 16)
    if tm_eff >= B:
        tm_eff = B                              # single full-extent block (always legal)
    grid = (pl.cdiv(B, tm_eff),)                # ragged last block handled/masked by Pallas

    row_map = lambda i: (i, 0)                  # batch-tiled arrays
    const_map = lambda i: (0, 0)                # VMEM-resident weights / biases

    vmem_limit = (48 if tm_eff <= 8192 else 96) * 1024 * 1024

    z, xr = pl.pallas_call(
        autoencoder_kernel,
        out_shape=(
            jax.ShapeDtypeStruct((B, latent_dim), od),
            jax.ShapeDtypeStruct((B, input_dim), od),
        ),
        grid=grid,
        in_specs=[pl.BlockSpec((tm_eff, input_dim), row_map)]
                 + [pl.BlockSpec(w.shape, const_map) for w in weights],
        out_specs=(pl.BlockSpec((tm_eff, latent_dim), row_map),
                   pl.BlockSpec((tm_eff, input_dim), row_map)),
        compiler_params=pltpu.CompilerParams(
            dimension_semantics=("parallel",),   # 2-TC sharding on v7x, no-op on 1-TC chips
            vmem_limit_bytes=vmem_limit,
        ),
    )(x.astype(cd), *weights)

    return z, xr


def init_params(key, input_dim, latent_dim, hidden=128):
    """Deterministic PyTorch-style (uniform +-1/sqrt(fan_in)) init for the 4 Linear layers."""
    def linear(k, fan_in, fan_out):
        k_w, k_b = jax.random.split(k)
        bound = 1.0 / jnp.sqrt(fan_in)
        w = jax.random.uniform(k_w, (fan_in, fan_out), jnp.float32, -bound, bound)
        b = jax.random.uniform(k_b, (1, fan_out), jnp.float32, -bound, bound)
        return w, b

    k1, k2, k3, k4 = jax.random.split(key, 4)
    w_e1, b_e1 = linear(k1, input_dim, hidden)     # encoder Linear(input_dim, 128)
    w_e2, b_e2 = linear(k2, hidden, latent_dim)    # encoder Linear(128, latent_dim)
    w_d1, b_d1 = linear(k3, latent_dim, hidden)    # decoder Linear(latent_dim, 128)
    w_d2, b_d2 = linear(k4, hidden, input_dim)     # decoder Linear(128, input_dim)
    return dict(w_e1=w_e1, b_e1=b_e1, w_e2=w_e2, b_e2=b_e2,
                w_d1=w_d1, b_d1=b_d1, w_d2=w_d2, b_d2=b_d2)


def reference_forward(x, p):
    h = jnp.maximum(x @ p["w_e1"] + p["b_e1"], 0.0)
    z = h @ p["w_e2"] + p["b_e2"]
    h2 = jnp.maximum(z @ p["w_d1"] + p["b_d1"], 0.0)
    xr = h2 @ p["w_d2"] + p["b_d2"]
    return z, xr


if __name__ == "__main__":
    INPUT_DIM, LATENT_DIM = 64, 32

    key = jax.random.PRNGKey(0)
    k_x1, k_x2, k_p = jax.random.split(key, 3)
    params = init_params(k_p, INPUT_DIM, LATENT_DIM)

    # --- small batch: single full-extent block, f32 path (tight tolerance; folded w_e2@w_d1 only
    #     changes rounding order) ---
    x8 = jax.random.normal(k_x1, (8, INPUT_DIM), dtype=jnp.float32)
    z_ref8, xr_ref8 = reference_forward(x8, params)
    z8, xr8 = jax.block_until_ready(autoencoder_forward(x8, params, compute_dtype=jnp.float32))
    assert z8.shape == (8, LATENT_DIM) and xr8.shape == (8, INPUT_DIM)
    assert jnp.allclose(z8, z_ref8, atol=1e-4, rtol=1e-4)
    assert jnp.allclose(xr8, xr_ref8, atol=1e-4, rtol=1e-4)

    # --- ragged multi-step grid: B=40 -> tm_eff=32, grid=2, last block masked by Pallas ---
    x40 = jax.random.normal(k_x2, (40, INPUT_DIM), dtype=jnp.float32)
    z_ref40, xr_ref40 = reference_forward(x40, params)
    z40, xr40 = jax.block_until_ready(autoencoder_forward(x40, params, compute_dtype=jnp.float32))
    assert z40.shape == (40, LATENT_DIM) and xr40.shape == (40, INPUT_DIM)
    assert jnp.allclose(z40, z_ref40, atol=1e-4, rtol=1e-4)
    assert jnp.allclose(xr40, xr_ref40, atol=1e-4, rtol=1e-4)

    # --- bf16 fast path: bf16 MXU operands + bf16 stored outputs, f32 accumulation/bias/ReLU ---
    z16, xr16 = jax.block_until_ready(
        autoencoder_forward(x40, params, compute_dtype=jnp.bfloat16, out_dtype=jnp.bfloat16))
    assert z16.dtype == jnp.bfloat16 and xr16.dtype == jnp.bfloat16
    assert jnp.allclose(z16.astype(jnp.float32), z_ref40, atol=5e-2, rtol=5e-2)
    assert jnp.allclose(xr16.astype(jnp.float32), xr_ref40, atol=5e-2, rtol=5e-2)

    print("KERNEL_OK")
</pallas_src>

<mosaic_0001>
module attributes {stable_mosaic.version = 11 : i64} {
  func.func @autoencoder_kernel(%arg0: i32, %arg1: memref<8x64xf32, #tpu.memory_space<vmem>>, %arg2: memref<64x128xf32, #tpu.memory_space<vmem>>, %arg3: memref<1x128xf32, #tpu.memory_space<vmem>>, %arg4: memref<128x160xf32, #tpu.memory_space<vmem>>, %arg5: memref<1x160xf32, #tpu.memory_space<vmem>>, %arg6: memref<128x64xf32, #tpu.memory_space<vmem>>, %arg7: memref<1x64xf32, #tpu.memory_space<vmem>>, %arg8: memref<8x32xf32, #tpu.memory_space<vmem>>, %arg9: memref<8x64xf32, #tpu.memory_space<vmem>>) attributes {dimension_semantics = [#tpu.dimension_semantics<parallel>], iteration_bounds = array<i64: 1>, scalar_prefetch = 0 : i64, scratch_operands = 0 : i64, tpu.core_type = #tpu.core_type<tc>, window_params = [{transform_indices = @transform_0, window_bounds = array<i64: 8, 64>}, {pipeline_mode = #tpu.pipeline_mode<synchronous>, transform_indices = @transform_1, window_bounds = array<i64: 64, 128>}, {pipeline_mode = #tpu.pipeline_mode<synchronous>, transform_indices = @transform_2, window_bounds = array<i64: 1, 128>}, {pipeline_mode = #tpu.pipeline_mode<synchronous>, transform_indices = @transform_3, window_bounds = array<i64: 128, 160>}, {pipeline_mode = #tpu.pipeline_mode<synchronous>, transform_indices = @transform_4, window_bounds = array<i64: 1, 160>}, {pipeline_mode = #tpu.pipeline_mode<synchronous>, transform_indices = @transform_5, window_bounds = array<i64: 128, 64>}, {pipeline_mode = #tpu.pipeline_mode<synchronous>, transform_indices = @transform_6, window_bounds = array<i64: 1, 64>}, {transform_indices = @transform_7, window_bounds = array<i64: 8, 32>}, {transform_indices = @transform_8, window_bounds = array<i64: 8, 64>}]} {
    %c0 = arith.constant 0 : index
    %c0_0 = arith.constant 0 : index
    %0 = vector.load %arg1[%c0, %c0_0] : memref<8x64xf32, #tpu.memory_space<vmem>>, vector<8x64xf32>
    %c0_1 = arith.constant 0 : index
    %c0_2 = arith.constant 0 : index
    %1 = vector.load %arg2[%c0_1, %c0_2] : memref<64x128xf32, #tpu.memory_space<vmem>>, vector<64x128xf32>
    %cst = arith.constant dense<0.000000e+00> : vector<8x128xf32>
    %2 = tpu.matmul %0, %1, %cst {dimension_numbers = #tpu.dot_dimension_numbers<[1], [0], [0], [1], [0, 0, 1, 1], [], []>} : vector<8x64xf32>, vector<64x128xf32>, vector<8x128xf32> -> vector<8x128xf32>
    %c0_3 = arith.constant 0 : index
    %c0_4 = arith.constant 0 : index
    %3 = vector.load %arg3[%c0_3, %c0_4] : memref<1x128xf32, #tpu.memory_space<vmem>>, vector<1x128xf32>
    %4 = vector.broadcast %3 : vector<1x128xf32> to vector<8x128xf32>
    %5 = arith.addf %2, %4 : vector<8x128xf32>
    %cst_5 = arith.constant 0.000000e+00 : f32
    %6 = vector.broadcast %cst_5 : f32 to vector<8x128xf32>
    %7 = arith.maximumf %5, %6 : vector<8x128xf32>
    %c0_6 = arith.constant 0 : index
    %c0_7 = arith.constant 0 : index
    %8 = vector.load %arg4[%c0_6, %c0_7] : memref<128x160xf32, #tpu.memory_space<vmem>>, vector<128x160xf32>
    %cst_8 = arith.constant dense<0.000000e+00> : vector<8x160xf32>
    %9 = tpu.matmul %7, %8, %cst_8 {dimension_numbers = #tpu.dot_dimension_numbers<[1], [0], [0], [1], [0, 0, 1, 1], [], []>} : vector<8x128xf32>, vector<128x160xf32>, vector<8x160xf32> -> vector<8x160xf32>
    %c0_9 = arith.constant 0 : index
    %c0_10 = arith.constant 0 : index
    %10 = vector.load %arg5[%c0_9, %c0_10] : memref<1x160xf32, #tpu.memory_space<vmem>>, vector<1x160xf32>
    %11 = vector.broadcast %10 : vector<1x160xf32> to vector<8x160xf32>
    %12 = arith.addf %9, %11 : vector<8x160xf32>
    %13 = vector.extract_strided_slice %12 {offsets = [0, 128], sizes = [8, 32], strides = [1, 1]} : vector<8x160xf32> to vector<8x32xf32>
    %c0_11 = arith.constant 0 : index
    %c0_12 = arith.constant 0 : index
    %14 = vector.load %arg8[%c0_11, %c0_12] : memref<8x32xf32, #tpu.memory_space<vmem>>, vector<8x32xf32>
    tpu.vector_store %arg8[%c0_11, %c0_12], %13 {strides = array<i32>} : memref<8x32xf32, #tpu.memory_space<vmem>>, vector<8x32xf32>,
    %15 = vector.extract_strided_slice %12 {offsets = [0, 0], sizes = [8, 128], strides = [1, 1]} : vector<8x160xf32> to vector<8x128xf32>
    %cst_13 = arith.constant 0.000000e+00 : f32
    %16 = vector.broadcast %cst_13 : f32 to vector<8x128xf32>
    %17 = arith.maximumf %15, %16 : vector<8x128xf32>
    %c0_14 = arith.constant 0 : index
    %c0_15 = arith.constant 0 : index
    %18 = vector.load %arg6[%c0_14, %c0_15] : memref<128x64xf32, #tpu.memory_space<vmem>>, vector<128x64xf32>
    %cst_16 = arith.constant dense<0.000000e+00> : vector<8x64xf32>
    %19 = tpu.matmul %17, %18, %cst_16 {dimension_numbers = #tpu.dot_dimension_numbers<[1], [0], [0], [1], [0, 0, 1, 1], [], []>} : vector<8x128xf32>, vector<128x64xf32>, vector<8x64xf32> -> vector<8x64xf32>
    %c0_17 = arith.constant 0 : index
    %c0_18 = arith.constant 0 : index
    %20 = vector.load %arg7[%c0_17, %c0_18] : memref<1x64xf32, #tpu.memory_space<vmem>>, vector<1x64xf32>
    %21 = vector.broadcast %20 : vector<1x64xf32> to vector<8x64xf32>
    %22 = arith.addf %19, %21 : vector<8x64xf32>
    %c0_19 = arith.constant 0 : index
    %c0_20 = arith.constant 0 : index
    %23 = vector.load %arg9[%c0_19, %c0_20] : memref<8x64xf32, #tpu.memory_space<vmem>>, vector<8x64xf32>
    tpu.vector_store %arg9[%c0_19, %c0_20], %22 {strides = array<i32>} : memref<8x64xf32, #tpu.memory_space<vmem>>, vector<8x64xf32>,
    return
  }
  func.func @transform_0(%arg0: i32) -> (i32, i32) {
    %c0_i32 = arith.constant 0 : i32
    %c0_i32_0 = arith.constant 0 : i32
    return %arg0, %c0_i32 : i32, i32
  }
  func.func @transform_1(%arg0: i32) -> (i32, i32) {
    %c0_i32 = arith.constant 0 : i32
    %c0_i32_0 = arith.constant 0 : i32
    %c0_i32_1 = arith.constant 0 : i32
    return %c0_i32, %c0_i32_0 : i32, i32
  }
  func.func @transform_2(%arg0: i32) -> (i32, i32) {
    %c0_i32 = arith.constant 0 : i32
    %c0_i32_0 = arith.constant 0 : i32
    %c0_i32_1 = arith.constant 0 : i32
    return %c0_i32, %c0_i32_0 : i32, i32
  }
  func.func @transform_3(%arg0: i32) -> (i32, i32) {
    %c0_i32 = arith.constant 0 : i32
    %c0_i32_0 = arith.constant 0 : i32
    %c0_i32_1 = arith.constant 0 : i32
    return %c0_i32, %c0_i32_0 : i32, i32
  }
  func.func @transform_4(%arg0: i32) -> (i32, i32) {
    %c0_i32 = arith.constant 0 : i32
    %c0_i32_0 = arith.constant 0 : i32
    %c0_i32_1 = arith.constant 0 : i32
    return %c0_i32, %c0_i32_0 : i32, i32
  }
  func.func @transform_5(%arg0: i32) -> (i32, i32) {
    %c0_i32 = arith.constant 0 : i32
    %c0_i32_0 = arith.constant 0 : i32
    %c0_i32_1 = arith.constant 0 : i32
    return %c0_i32, %c0_i32_0 : i32, i32
  }
  func.func @transform_6(%arg0: i32) -> (i32, i32) {
    %c0_i32 = arith.constant 0 : i32
    %c0_i32_0 = arith.constant 0 : i32
    %c0_i32_1 = arith.constant 0 : i32
    return %c0_i32, %c0_i32_0 : i32, i32
  }
  func.func @transform_7(%arg0: i32) -> (i32, i32) {
    %c0_i32 = arith.constant 0 : i32
    %c0_i32_0 = arith.constant 0 : i32
    return %arg0, %c0_i32 : i32, i32
  }
  func.func @transform_8(%arg0: i32) -> (i32, i32) {
    %c0_i32 = arith.constant 0 : i32
    %c0_i32_0 = arith.constant 0 : i32
    return %arg0, %c0_i32 : i32, i32
  }
}

</mosaic_0001>

<llo_original>
// kernel: tpu_custom_call.1
$region0: #{tpu_custom_call.1}
  #allocation0 [shape = 'u32[]', space=smem, size = 0x4, offset = 0x4, fixed_abs, tag = 'smem constant byte address 0x4 - core index']
  #allocation1 [shape = 'u32[144,128]{1,0:T(1,128)}', space=vmem, size = 0x12000, scoped, tag = 'internal scratch']
  %s0 = inlined_call_operand.vmem [shape: f32[8,64], index: 0, kind: input, shape index: {}]
  %s1 = inlined_call_operand.vmem [shape: f32[64,128], index: 1, kind: input, shape index: {}]
  %s2 = inlined_call_operand.vmem [shape: f32[1,128], index: 2, kind: input, shape index: {}]
  %s3 = inlined_call_operand.vmem [shape: f32[128,160], index: 3, kind: input, shape index: {}]
  %s4 = inlined_call_operand.vmem [shape: f32[1,160], index: 4, kind: input, shape index: {}]
  %s5 = inlined_call_operand.vmem [shape: f32[128,64], index: 5, kind: input, shape index: {}]
  %s6 = inlined_call_operand.vmem [shape: f32[1,64], index: 6, kind: input, shape index: {}]
  %s7 = inlined_call_operand.hbm [shape: f32[8,32], index: 7, kind: output, shape index: {0}]
  %s8 = inlined_call_operand.hbm [shape: f32[8,64], index: 8, kind: output, shape index: {1}]
  %9 = xla_tuple %s7, %s8
  %s10 = sld [smem:[#allocation0]]
  $region46: #{tpu_custom_call.1} parent=0
    _
  %s12 = ssub.s32 1, %s10
  %s13 = scalar_select 0, %s12, %s10
  $region1: #{tpu_custom_call.1} parent=0
    #allocation2 [shape = 'u8[4096]{0}', space=vmem, size = 0x1000, scoped, tag = 'output window, operand 0, single buffered']
    #allocation3 [shape = 's32[1]{0}', space=sflag, size = 0x4, scoped, tag = 'scoped memory for tpu_custom_call.1']
    #allocation4 [shape = 'u8[4096]{0}', space=vmem, size = 0x1000, scoped, tag = 'output window, operand 1, single buffered']
    #allocation5 [shape = 's32[1]{0}', space=sflag, size = 0x4, scoped, tag = 'scoped memory for tpu_custom_call.1']
    %14 = vsyncpa [#allocation3], 0
    %15 = vsyncpa [#allocation5], 0
    // Predicated region
    $region2: #{tpu_custom_call.1} parent=1 // pred_check
      _
    $region3: #{tpu_custom_call.1} parent=1 // pred_check_branch
      %17 = sbr.rel (0) target = $region5
    $region4: #{tpu_custom_call.1} parent=1 // pred_region
      _
    $region5: #{tpu_custom_call.1} parent=1 // pred_fallthru
      _
    // Predicated region
    $region6: #{tpu_custom_call.1} parent=1 // pred_check
      _
    $region7: #{tpu_custom_call.1} parent=1 // pred_check_branch
      %19 = sbr.rel (0) target = $region9
    $region8: #{tpu_custom_call.1} parent=1 // pred_region
      _
    $region9: #{tpu_custom_call.1} parent=1 // pred_fallthru
      _
    // Predicated region
    $region10: #{tpu_custom_call.1} parent=1 // pred_check
      _
    $region11: #{tpu_custom_call.1} parent=1 // pred_check_branch
      %21 = sbr.rel (0) target = $region13
    $region12: #{tpu_custom_call.1} parent=1 // pred_region
      _
    $region13: #{tpu_custom_call.1} parent=1 // pred_fallthru
      _
    // Predicated region
    $region14: #{tpu_custom_call.1} parent=1 // pred_check
      _
    $region15: #{tpu_custom_call.1} parent=1 // pred_check_branch
      %23 = sbr.rel (0) target = $region17
    $region16: #{tpu_custom_call.1} parent=1 // pred_region
      _
    $region17: #{tpu_custom_call.1} parent=1 // pred_fallthru
      _
    // Predicated region
    $region18: #{tpu_custom_call.1} parent=1 // pred_check
      _
    $region19: #{tpu_custom_call.1} parent=1 // pred_check_branch
      %25 = sbr.rel (0) target = $region21
    $region20: #{tpu_custom_call.1} parent=1 // pred_region
      _
    $region21: #{tpu_custom_call.1} parent=1 // pred_fallthru
      _
    // Predicated region
    $region22: #{tpu_custom_call.1} parent=1 // pred_check
      _
    $region23: #{tpu_custom_call.1} parent=1 // pred_check_branch
      %27 = sbr.rel (0) target = $region25
    $region24: #{tpu_custom_call.1} parent=1 // pred_region
      _
    $region25: #{tpu_custom_call.1} parent=1 // pred_fallthru
      _
    // Predicated region
    $region26: #{tpu_custom_call.1} parent=1 // pred_check
      _
    $region27: #{tpu_custom_call.1} parent=1 // pred_check_branch
      %29 = sbr.rel (0) target = $region29
    $region28: #{tpu_custom_call.1} parent=1 // pred_region
      _
    $region29: #{tpu_custom_call.1} parent=1 // pred_fallthru
      _
    %v30 = vld [vmem:[%s0] sm:$0xff]
    %v31 = vld [vmem:[%s1] sm:$0xff]
    %v32 = vld [vmem:[%s1 + $0x8] sm:$0xff]
    %v33 = vld [vmem:[%s1 + $0x10] sm:$0xff]
    %v34 = vld [vmem:[%s1 + $0x18] sm:$0xff]
    %v35 = vld [vmem:[%s1 + $0x20] sm:$0xff]
    %v36 = vld [vmem:[%s1 + $0x28] sm:$0xff]
    %v37 = vld [vmem:[%s1 + $0x30] sm:$0xff]
    %v38 = vld [vmem:[%s1 + $0x38] sm:$0xff]
    %v39 = vld [vmem:[%s2] sm:$0x1]
    %v41 = vlaneseq
    %v42 = vshrl.u32 %v41, 7
    %v43 = vsub.s32 0, %v42
    %v44 = vrot.slane %v39, %v43
    %vm46 = vcmask 523264
    %v48 = vsel %vm46, %v30, 0
    %50 = vmatprep.subr.mxu0 0.0
    %51 = vmatpush1.msra.mxu0 %v31
    %52 = vmatprep.subr.mxu0 0.0
    %53 = vmatpush1.msra.mxu0 %v32
    %54 = vmatprep.subr.mxu0 0.0
    %55 = vmatpush1.msra.mxu0 %v33
    %56 = vmatprep.subr.mxu0 0.0
    %57 = vmatpush1.msra.mxu0 %v34
    %58 = vmatprep.subr.mxu0 0.0
    %59 = vmatpush1.msra.mxu0 %v35
    %60 = vmatprep.subr.mxu0 0.0
    %61 = vmatpush1.msra.mxu0 %v36
    %62 = vmatprep.subr.mxu0 0.0
    %63 = vmatpush1.msra.mxu0 %v37
    %64 = vmatprep.subr.mxu0 0.0
    %65 = vmatpush1.msra.mxu0 %v38
    %66 = vmatprep.subr.mxu0 0.0
    %67 = vmatpush1.msra.mxu0 0.0
    %68 = vmatprep.subr.mxu0 0.0
    %69 = vmatpush1.msra.mxu0 0.0
    %70 = vmatprep.subr.mxu0 0.0
    %71 = vmatpush1.msra.mxu0 0.0
    %72 = vmatprep.subr.mxu0 0.0
    %73 = vmatpush1.msra.mxu0 0.0
    %74 = vmatprep.subr.mxu0 0.0
    %75 = vmatpush1.msra.mxu0 0.0
    %76 = vmatprep.subr.mxu0 0.0
    %77 = vmatpush1.msra.mxu0 0.0
    %78 = vmatprep.subr.mxu0 0.0
    %79 = vmatpush1.msra.mxu0 0.0
    %80 = vmatprep.subr.mxu0 0.0
    %81 = vmatpush1.msra.mxu0 0.0
    %82 = vmatprep.subr.mxu0 0.0
    %83 = vmatpush1.msra.mxu0 0.0
    %84 = vmatprep.subr.mxu0 0.0
    %85 = vmatpush1.msra.mxu0 0.0
    %86 = vmatprep.subr.mxu0 0.0
    %87 = vmatpush1.msra.mxu0 0.0
    %88 = vmatprep.subr.mxu0 0.0
    %89 = vmatpush1.msra.mxu0 0.0
    %90 = vmatprep.subr.mxu0 0.0
    %91 = vmatpush1.msra.mxu0 0.0
    %92 = vmatprep.subr.mxu0 0.0
    %93 = vmatpush1.msra.mxu0 0.0
    %94 = vmatprep.subr.mxu0 0.0
    %95 = vmatpush1.msra.mxu0 0.0
    %96 = vmatprep.subr.mxu0 0.0
    %97 = vmatpush1.msra.mxu0 0.0
    %98 = vmatprep.subr.mxu0 0.0
    %99 = vmatpush1.msra.mxu0 0.0
    %100 = vmatprep.subr.mxu0 0.0
    %101 = vmatpush1.msra.mxu0 0.0
    %102 = vmatprep.subr.mxu0 0.0
    %103 = vmatpush1.msra.mxu0 0.0
    %104 = vmatprep.subr.mxu0 0.0
    %105 = vmatpush1.msra.mxu0 0.0
    %106 = vmatprep.subr.mxu0 0.0
    %107 = vmatpush1.msra.mxu0 0.0
    %108 = vmatprep.subr.mxu0 0.0
    %109 = vmatpush1.msra.mxu0 0.0
    %110 = vmatprep.subr.mxu0 0.0
    %111 = vmatpush1.msra.mxu0 0.0
    %112 = vmatprep.subr.mxu0 0.0
    %113 = vmatpush1.msra.mxu0 0.0
    %114 = vmatprep.mubr.f32.mxu0 0.0
    %115 = vmatmul.mubr.f32.gmra.mrb[0].mxu0 %v48
    %v116 = vpop.f32.mrb[0].mxu0
    %v117 = vadd.f32 %v44, %v116
    %v118 = vpop.f32.mrb[0].mxu0
    %119 = vdwg.mxu0
    %v120 = vmax.f32 %v117, 0.0
    %v121 = vld [vmem:[%s3] sm:$0xff]
    %v122 = vld [vmem:[%s3 + $0x8] sm:$0xff]
    %v123 = vld [vmem:[%s3 + $0x10] sm:$0xff]
    %v124 = vld [vmem:[%s3 + $0x18] sm:$0xff]
    %v125 = vld [vmem:[%s3 + $0x20] sm:$0xff]
    %v126 = vld [vmem:[%s3 + $0x28] sm:$0xff]
    %v127 = vld [vmem:[%s3 + $0x30] sm:$0xff]
    %v128 = vld [vmem:[%s3 + $0x38] sm:$0xff]
    %v129 = vld [vmem:[%s3 + $0x40] sm:$0xff]
    %v130 = vld [vmem:[%s3 + $0x48] sm:$0xff]
    %v131 = vld [vmem:[%s3 + $0x50] sm:$0xff]
    %v132 = vld [vmem:[%s3 + $0x58] sm:$0xff]
    %v133 = vld [vmem:[%s3 + $0x60] sm:$0xff]
    %v134 = vld [vmem:[%s3 + $0x68] sm:$0xff]
    %v135 = vld [vmem:[%s3 + $0x70] sm:$0xff]
    %v136 = vld [vmem:[%s3 + $0x78] sm:$0xff]
    %v137 = vld [vmem:[%s3 + $0x80] sm:$0xff]
    %v138 = vld [vmem:[%s3 + $0x88] sm:$0xff]
    %v139 = vld [vmem:[%s3 + $0x90] sm:$0xff]
    %v140 = vld [vmem:[%s3 + $0x98] sm:$0xff]
    %v141 = vld [vmem:[%s3 + $0xa0] sm:$0xff]
    %v142 = vld [vmem:[%s3 + $0xa8] sm:$0xff]
    %v143 = vld [vmem:[%s3 + $0xb0] sm:$0xff]
    %v144 = vld [vmem:[%s3 + $0xb8] sm:$0xff]
    %v145 = vld [vmem:[%s3 + $0xc0] sm:$0xff]
    %v146 = vld [vmem:[%s3 + $0xc8] sm:$0xff]
    %v147 = vld [vmem:[%s3 + $0xd0] sm:$0xff]
    %v148 = vld [vmem:[%s3 + $0xd8] sm:$0xff]
    %v149 = vld [vmem:[%s3 + $0xe0] sm:$0xff]
    %v150 = vld [vmem:[%s3 + $0xe8] sm:$0xff]
    %v151 = vld [vmem:[%s3 + $0xf0] sm:$0xff]
    %v152 = vld [vmem:[%s3 + $0xf8] sm:$0xff]
    %v153 = vld [vmem:[%s4] sm:$0x3]
    %v155 = vlaneseq
    %v156 = vshrl.u32 %v155, 7
    %v157 = vsub.s32 0, %v156
    %v158 = vrot.slane %v153, %v157
    %v159 = vlaneseq
    %v160 = vshrl.u32 %v159, 7
    %v161 = vsub.s32 1, %v160
    %v162 = vrot.slane %v153, %v161
    %165 = vmatprep.subr.mxu0 %v122
    %166 = vmatpush1.msra.mxu0 %v121
    %167 = vmatprep.subr.mxu0 %v124
    %168 = vmatpush1.msra.mxu0 %v123
    %169 = vmatprep.subr.mxu0 %v126
    %170 = vmatpush1.msra.mxu0 %v125
    %171 = vmatprep.subr.mxu0 %v128
    %172 = vmatpush1.msra.mxu0 %v127
    %173 = vmatprep.subr.mxu0 %v130
    %174 = vmatpush1.msra.mxu0 %v129
    %175 = vmatprep.subr.mxu0 %v132
    %176 = vmatpush1.msra.mxu0 %v131
    %177 = vmatprep.subr.mxu0 %v134
    %178 = vmatpush1.msra.mxu0 %v133
    %179 = vmatprep.subr.mxu0 %v136
    %180 = vmatpush1.msra.mxu0 %v135
    %181 = vmatprep.subr.mxu0 %v138
    %182 = vmatpush1.msra.mxu0 %v137
    %183 = vmatprep.subr.mxu0 %v140
    %184 = vmatpush1.msra.mxu0 %v139
    %185 = vmatprep.subr.mxu0 %v142
    %186 = vmatpush1.msra.mxu0 %v141
    %187 = vmatprep.subr.mxu0 %v144
    %188 = vmatpush1.msra.mxu0 %v143
    %189 = vmatprep.subr.mxu0 %v146
    %190 = vmatpush1.msra.mxu0 %v145
    %191 = vmatprep.subr.mxu0 %v148
    %192 = vmatpush1.msra.mxu0 %v147
    %193 = vmatprep.subr.mxu0 %v150
    %194 = vmatpush1.msra.mxu0 %v149
    %195 = vmatprep.subr.mxu0 %v152
    %196 = vmatpush1.msra.mxu0 %v151
    %197 = vmatprep.subr.mxu0 0.0
    %198 = vmatpush1.msra.mxu0 0.0
    %199 = vmatprep.subr.mxu0 0.0
    %200 = vmatpush1.msra.mxu0 0.0
    %201 = vmatprep.subr.mxu0 0.0
    %202 = vmatpush1.msra.mxu0 0.0
    %203 = vmatprep.subr.mxu0 0.0
    %204 = vmatpush1.msra.mxu0 0.0
    %205 = vmatprep.subr.mxu0 0.0
    %206 = vmatpush1.msra.mxu0 0.0
    %207 = vmatprep.subr.mxu0 0.0
    %208 = vmatpush1.msra.mxu0 0.0
    %209 = vmatprep.subr.mxu0 0.0
    %210 = vmatpush1.msra.mxu0 0.0
    %211 = vmatprep.subr.mxu0 0.0
    %212 = vmatpush1.msra.mxu0 0.0
    %213 = vmatprep.subr.mxu0 0.0
    %214 = vmatpush1.msra.mxu0 0.0
    %215 = vmatprep.subr.mxu0 0.0
    %216 = vmatpush1.msra.mxu0 0.0
    %217 = vmatprep.subr.mxu0 0.0
    %218 = vmatpush1.msra.mxu0 0.0
    %219 = vmatprep.subr.mxu0 0.0
    %220 = vmatpush1.msra.mxu0 0.0
    %221 = vmatprep.subr.mxu0 0.0
    %222 = vmatpush1.msra.mxu0 0.0
    %223 = vmatprep.subr.mxu0 0.0
    %224 = vmatpush1.msra.mxu0 0.0
    %225 = vmatprep.subr.mxu0 0.0
    %226 = vmatpush1.msra.mxu0 0.0
    %227 = vmatprep.subr.mxu0 0.0
    %228 = vmatpush1.msra.mxu0 0.0
    %229 = vmatprep.mubr.f32.mxu0 0.0
    %230 = vmatmul.mubr.f32.gmra.mrb[0].mxu0 %v120
    %v231 = vpop.f32.mrb[0].mxu0
    %v232 = vadd.f32 %v158, %v231
    %v233 = vpop.f32.mrb[0].mxu0
    %v234 = vadd.f32 %v162, %v233
    %235 = vdwg.mxu0
    %vm236 = vcmask 261120
    %237 = vst.msk [vmem:[#allocation2] sm:$0xff] %vm236, %v234
    %v238 = vmax.f32 %v232, 0.0
    %v239 = vld [vmem:[%s5] sm:$0xff]
    %v240 = vld [vmem:[%s5 + $0x8] sm:$0xff]
    %v241 = vld [vmem:[%s5 + $0x10] sm:$0xff]
    %v242 = vld [vmem:[%s5 + $0x18] sm:$0xff]
    %v243 = vld [vmem:[%s5 + $0x20] sm:$0xff]
    %v244 = vld [vmem:[%s5 + $0x28] sm:$0xff]
    %v245 = vld [vmem:[%s5 + $0x30] sm:$0xff]
    %v246 = vld [vmem:[%s5 + $0x38] sm:$0xff]
    %v247 = vld [vmem:[%s5 + $0x40] sm:$0xff]
    %v248 = vld [vmem:[%s5 + $0x48] sm:$0xff]
    %v249 = vld [vmem:[%s5 + $0x50] sm:$0xff]
    %v250 = vld [vmem:[%s5 + $0x58] sm:$0xff]
    %v251 = vld [vmem:[%s5 + $0x60] sm:$0xff]
    %v252 = vld [vmem:[%s5 + $0x68] sm:$0xff]
    %v253 = vld [vmem:[%s5 + $0x70] sm:$0xff]
    %v254 = vld [vmem:[%s5 + $0x78] sm:$0xff]
    %v255 = vld [vmem:[%s6] sm:$0x1]
    %v257 = vlaneseq
    %v258 = vshrl.u32 %v257, 7
    %v259 = vsub.s32 0, %v258
    %v260 = vrot.slane %v255, %v259
    %262 = vmatprep.subr.mxu0 0.0
    %263 = vmatpush1.msra.mxu0 %v239
    %264 = vmatprep.subr.mxu0 0.0
    %265 = vmatpush1.msra.mxu0 %v240
    %266 = vmatprep.subr.mxu0 0.0
    %267 = vmatpush1.msra.mxu0 %v241
    %268 = vmatprep.subr.mxu0 0.0
    %269 = vmatpush1.msra.mxu0 %v242
    %270 = vmatprep.subr.mxu0 0.0
    %271 = vmatpush1.msra.mxu0 %v243
    %272 = vmatprep.subr.mxu0 0.0
    %273 = vmatpush1.msra.mxu0 %v244
    %274 = vmatprep.subr.mxu0 0.0
    %275 = vmatpush1.msra.mxu0 %v245
    %276 = vmatprep.subr.mxu0 0.0
    %277 = vmatpush1.msra.mxu0 %v246
    %278 = vmatprep.subr.mxu0 0.0
    %279 = vmatpush1.msra.mxu0 %v247
    %280 = vmatprep.subr.mxu0 0.0
    %281 = vmatpush1.msra.mxu0 %v248
    %282 = vmatprep.subr.mxu0 0.0
    %283 = vmatpush1.msra.mxu0 %v249
    %284 = vmatprep.subr.mxu0 0.0
    %285 = vmatpush1.msra.mxu0 %v250
    %286 = vmatprep.subr.mxu0 0.0
    %287 = vmatpush1.msra.mxu0 %v251
    %288 = vmatprep.subr.mxu0 0.0
    %289 = vmatpush1.msra.mxu0 %v252
    %290 = vmatprep.subr.mxu0 0.0
    %291 = vmatpush1.msra.mxu0 %v253
    %292 = vmatprep.subr.mxu0 0.0
    %293 = vmatpush1.msra.mxu0 %v254
    %294 = vmatprep.subr.mxu0 0.0
    %295 = vmatpush1.msra.mxu0 0.0
    %296 = vmatprep.subr.mxu0 0.0
    %297 = vmatpush1.msra.mxu0 0.0
    %298 = vmatprep.subr.mxu0 0.0
    %299 = vmatpush1.msra.mxu0 0.0
    %300 = vmatprep.subr.mxu0 0.0
    %301 = vmatpush1.msra.mxu0 0.0
    %302 = vmatprep.subr.mxu0 0.0
    %303 = vmatpush1.msra.mxu0 0.0
    %304 = vmatprep.subr.mxu0 0.0
    %305 = vmatpush1.msra.mxu0 0.0
    %306 = vmatprep.subr.mxu0 0.0
    %307 = vmatpush1.msra.mxu0 0.0
    %308 = vmatprep.subr.mxu0 0.0
    %309 = vmatpush1.msra.mxu0 0.0
    %310 = vmatprep.subr.mxu0 0.0
    %311 = vmatpush1.msra.mxu0 0.0
    %312 = vmatprep.subr.mxu0 0.0
    %313 = vmatpush1.msra.mxu0 0.0
    %314 = vmatprep.subr.mxu0 0.0
    %315 = vmatpush1.msra.mxu0 0.0
    %316 = vmatprep.subr.mxu0 0.0
    %317 = vmatpush1.msra.mxu0 0.0
    %318 = vmatprep.subr.mxu0 0.0
    %319 = vmatpush1.msra.mxu0 0.0
    %320 = vmatprep.subr.mxu0 0.0
    %321 = vmatpush1.msra.mxu0 0.0
    %322 = vmatprep.subr.mxu0 0.0
    %323 = vmatpush1.msra.mxu0 0.0
    %324 = vmatprep.subr.mxu0 0.0
    %325 = vmatpush1.msra.mxu0 0.0
    %326 = vmatprep.mubr.f32.mxu0 0.0
    %327 = vmatmul.mubr.f32.gmra.mrb[0].mxu0 %v238
    %v328 = vpop.f32.mrb[0].mxu0
    %v329 = vadd.f32 %v260, %v328
    %v330 = vpop.f32.mrb[0].mxu0
    %331 = vdwg.mxu0
    %332 = vst.msk [vmem:[#allocation4] sm:$0xff] %vm46, %v329
    // Predicated region
    $region30: #{tpu_custom_call.1} parent=1 // pred_check
      _
    $region31: #{tpu_custom_call.1} parent=1 // pred_check_branch
      %334 = sbr.rel (0) target = $region33
    $region32: #{tpu_custom_call.1} parent=1 // pred_region
      %s336 = ssub.s32 128, 128
      %337 = vsyncadd [#allocation3], %s336
      %s339 = sshll.u32 [#allocation2], 4
      %s340 = int_to_ptr.vmem [resolvable:$true] %s339
      %342 = dma.vmem_to_hbm [thread:$0]  %s340, 128, %s7, [#allocation3]
    $region33: #{tpu_custom_call.1} parent=1 // pred_fallthru
      _
    // Predicated region
    $region34: #{tpu_custom_call.1} parent=1 // pred_check
      _
    $region35: #{tpu_custom_call.1} parent=1 // pred_check_branch
      %344 = sbr.rel (0) target = $region37
    $region36: #{tpu_custom_call.1} parent=1 // pred_region
      %s346 = ssub.s32 128, 128
      %347 = vsyncadd [#allocation5], %s346
      %s349 = sshll.u32 [#allocation4], 4
      %s350 = int_to_ptr.vmem [resolvable:$true] %s349
      %352 = dma.vmem_to_hbm [thread:$0]  %s350, 128, %s8, [#allocation5]
    $region37: #{tpu_custom_call.1} parent=1 // pred_fallthru
      _
    // Predicated region
    $region38: #{tpu_custom_call.1} parent=1 // pred_check
      _
    $region39: #{tpu_custom_call.1} parent=1 // pred_check_branch
      %354 = sbr.rel (0) target = $region41
    $region40: #{tpu_custom_call.1} parent=1 // pred_region
      %355 = dma.done [#allocation3], 128
    $region41: #{tpu_custom_call.1} parent=1 // pred_fallthru
      _
    // Predicated region
    $region42: #{tpu_custom_call.1} parent=1 // pred_check
      _
    $region43: #{tpu_custom_call.1} parent=1 // pred_check_branch
      %357 = sbr.rel (0) target = $region45
    $region44: #{tpu_custom_call.1} parent=1 // pred_region
      %358 = dma.done [#allocation5], 128
    $region45: #{tpu_custom_call.1} parent=1 // pred_fallthru
      _
    %359 = vsyncpa [#allocation3], 1
    %360 = vsyncpa [#allocation5], 1

</llo_original>
